<compile_context>
chip_gen: v7x
topology: tpu7x:2x2x1
jax: 0.10.0
libtpu: 0.0.40
codegen_flags: <defaults>
</compile_context>

<pallas_src>
import math
from typing import NamedTuple, Optional

import jax
import jax.numpy as jnp
from jax.experimental import pallas as pl
from jax.experimental.pallas import tpu as pltpu


def _round_up(x, m):
    return ((x + m - 1) // m) * m


def _sigmoid(x):
    # exp -> EUP, approx reciprocal -> EUP: keeps the divide off the VALU.
    return pl.reciprocal(1.0 + jnp.exp(-x), approx=True)


class PackedGRUWeights(NamedTuple):
    Wp: jax.Array            # (I, 3*Hp)  columns [z | r | s_hat] from Wz/Wr/Ws^T
    Cp: jax.Array            # (C, 3*Hp)  columns [z | r | s_hat] from Cz/Cr/Cs^T
    Up: jax.Array            # (H, 3*Hp)  columns [Uz^T | Ur^T | 0]
    Usp: jax.Array           # (Hp, Hp)   Us^T zero-padded (rows & cols)
    bias: jax.Array          # (1, 3*Hp)  f32, [bz | br | bs] zero-padded
    Ipad: Optional[jax.Array]  # (H, Hp) identity embed; None when H == Hp
    input_size: int
    hidden_size: int
    ctx_size: int
    hp: int


def pack_decoder_gru_weights(Ws, Wr, Wz, Us, Ur, Uz, Cs, Cr, Cz, bs, br, bz,
                             *, matmul_dtype=None):
    """Transpose/stack/pad the DecoderGRUCell weights ONCE (reuse per step)."""
    H, I = Ws.shape
    C = Cs.shape[1]
    Hp = _round_up(H, 128)
    if matmul_dtype is None:
        matmul_dtype = Ws.dtype

    def pack3(mz, mr, ms, rows):
        out = jnp.zeros((rows, 3 * Hp), matmul_dtype)
        out = out.at[:, 0:H].set(mz.T.astype(matmul_dtype))
        out = out.at[:, Hp:Hp + H].set(mr.T.astype(matmul_dtype))
        if ms is not None:
            out = out.at[:, 2 * Hp:2 * Hp + H].set(ms.T.astype(matmul_dtype))
        return out

    Wp = pack3(Wz, Wr, Ws, I)
    Cp = pack3(Cz, Cr, Cs, C)
    Up = pack3(Uz, Ur, None, H)   # s feeds s_hat only through (s*r)@Us
    Usp = jnp.zeros((Hp, Hp), matmul_dtype).at[:H, :H].set(Us.T.astype(matmul_dtype))
    bias = jnp.zeros((1, 3 * Hp), jnp.float32)
    bias = (bias.at[0, 0:H].set(bz.astype(jnp.float32))
                .at[0, Hp:Hp + H].set(br.astype(jnp.float32))
                .at[0, 2 * Hp:2 * Hp + H].set(bs.astype(jnp.float32)))
    Ipad = None
    if Hp != H:
        Ipad = jnp.zeros((H, Hp), matmul_dtype).at[:, :H].set(
            jnp.eye(H, dtype=matmul_dtype))
    return PackedGRUWeights(Wp, Cp, Up, Usp, bias, Ipad, I, H, C, Hp)


def _make_gru_kernel(hp: int, padded: bool):
    def kernel(y_ref, ctx_ref, s_ref, wp_ref, cp_ref, up_ref, usp_ref, b_ref, *rest):
        if padded:
            ipad_ref, out_ref = rest
        else:
            (out_ref,) = rest

        f32 = jnp.float32
        wdt = wp_ref.dtype
        y = y_ref[...].astype(wdt)
        c = ctx_ref[...].astype(wdt)
        s = s_ref[...].astype(wdt)

        # One lane-dense pre-activation slab for all three gates: (tb, 3*Hp).
        pre = (jnp.dot(y, wp_ref[...], preferred_element_type=f32)
               + jnp.dot(c, cp_ref[...], preferred_element_type=f32)
               + jnp.dot(s, up_ref[...], preferred_element_type=f32)
               + b_ref[...])

        z = _sigmoid(pre[:, 0:hp])
        r = _sigmoid(pre[:, hp:2 * hp])

        if padded:
            # Lane-dense (zero-padded to Hp) copy of s via a cheap identity-embed
            # matmul on the otherwise idle MXU.
            s_wide = jnp.dot(s, ipad_ref[...], preferred_element_type=f32)
        else:
            s_wide = s.astype(f32)

        sr = (s_wide * r).astype(wdt)
        s_hat = jnp.maximum(
            pre[:, 2 * hp:3 * hp]
            + jnp.dot(sr, usp_ref[...], preferred_element_type=f32),
            0.0)

        # new_s = (1 - z) * s + z * s_hat  ==  s + z * (s_hat - s)
        out_ref[...] = (s_wide + z * (s_hat - s_wide)).astype(out_ref.dtype)

    return kernel


def decoder_gru_cell_forward(y, ctx, last_s, packed: PackedGRUWeights, *, block_b=512):
    """Pallas equivalent of DecoderGRUCell.forward(y, ctx, last_s)."""
    B, I = y.shape
    C = ctx.shape[1]
    H = last_s.shape[1]
    assert (I, H, C) == (packed.input_size, packed.hidden_size, packed.ctx_size)
    Hp = packed.hp
    out_dtype = last_s.dtype
    padded = packed.Ipad is not None

    in_itemsize = max(jnp.dtype(a.dtype).itemsize for a in (y, ctx, last_s))
    out_itemsize = jnp.dtype(out_dtype).itemsize
    w_itemsize = jnp.dtype(packed.Wp.dtype).itemsize
    w_bytes = (packed.Wp.size + packed.Cp.size + packed.Up.size + packed.Usp.size
               + (packed.Ipad.size if padded else 0)) * w_itemsize + packed.bias.size * 4

    def vmem_need(tb):
        # resident weights (single-buffered) + double-buffered activation/out tiles
        return (w_bytes
                + 2 * tb * (I + C + H) * in_itemsize
                + 2 * tb * Hp * out_itemsize)

    try:
        vmem_cap = pltpu.get_tpu_info().vmem_capacity_bytes
    except Exception:
        vmem_cap = 64 * 1024 * 1024   # v7x per-TensorCore floor

    # Batch tile: sublane-dense and large (amortize ~0.35us/step), but split
    # into >= 2 steps so the "parallel" axis can shard over v7x's 2 TCs.
    tb = min(block_b, _round_up(pl.cdiv(B, 2), 8))
    if tb >= B:
        tb = B                           # single step; full-dim block is always legal
    while tb > 8 and vmem_need(tb) > int(0.70 * vmem_cap):
        tb = _round_up(tb // 2, 8)
    n_steps = pl.cdiv(B, tb)             # ragged last tile handled by the pipeline

    vmem_limit = int(min(0.85 * vmem_cap,
                         max(1.25 * vmem_need(tb) + (4 << 20), 16 << 20)))

    cost = pl.CostEstimate(
        flops=2 * B * (3 * Hp * (I + C + H) + Hp * Hp + (H * Hp if padded else 0))
        + 12 * B * Hp,
        transcendentals=4 * B * Hp,      # 2 exp + 2 approx reciprocal per element
        bytes_accessed=in_itemsize * B * (I + C + H) + out_itemsize * B * Hp + w_bytes,
    )

    resident = pl.Buffered(1)            # constant-index weight blocks: 1 buffer
    in_specs = [
        pl.BlockSpec((tb, I), lambda i: (i, 0)),                               # y
        pl.BlockSpec((tb, C), lambda i: (i, 0)),                               # ctx
        pl.BlockSpec((tb, H), lambda i: (i, 0)),                               # last_s
        pl.BlockSpec((I, 3 * Hp), lambda i: (0, 0), pipeline_mode=resident),   # Wp
        pl.BlockSpec((C, 3 * Hp), lambda i: (0, 0), pipeline_mode=resident),   # Cp
        pl.BlockSpec((H, 3 * Hp), lambda i: (0, 0), pipeline_mode=resident),   # Up
        pl.BlockSpec((Hp, Hp), lambda i: (0, 0), pipeline_mode=resident),      # Usp
        pl.BlockSpec((1, 3 * Hp), lambda i: (0, 0), pipeline_mode=resident),   # bias
    ]
    args = [y, ctx, last_s, packed.Wp, packed.Cp, packed.Up, packed.Usp, packed.bias]
    if padded:
        in_specs.append(pl.BlockSpec((H, Hp), lambda i: (0, 0), pipeline_mode=resident))
        args.append(packed.Ipad)

    out = pl.pallas_call(
        _make_gru_kernel(Hp, padded),
        out_shape=jax.ShapeDtypeStruct((B, Hp), out_dtype),
        grid=(n_steps,),
        in_specs=in_specs,
        out_specs=pl.BlockSpec((tb, Hp), lambda i: (i, 0)),
        compiler_params=pltpu.CompilerParams(
            dimension_semantics=("parallel",),   # shard batch over both v7x TCs
            vmem_limit_bytes=vmem_limit,
        ),
        cost_estimate=cost,
    )(*args)

    return out[:, :H] if padded else out


def _reference_forward(y, ctx, s, Ws, Wr, Wz, Us, Ur, Uz, Cs, Cr, Cz, bs, br, bz):
    z = jax.nn.sigmoid(y @ Wz.T + s @ Uz.T + ctx @ Cz.T + bz)
    r = jax.nn.sigmoid(y @ Wr.T + s @ Ur.T + ctx @ Cr.T + br)
    s_hat = jax.nn.relu(y @ Ws.T + (s * r) @ Us.T + ctx @ Cs.T + bs)
    return (1.0 - z) * s + z * s_hat


if __name__ == "__main__":
    key = jax.random.PRNGKey(0)
    input_size, hidden_size, ctx_size = 32, 32, 48
    batch = 8

    # Deterministic init matching reset_parameters(): uniform(-stdv, stdv).
    stdv = 1.0 / math.sqrt(hidden_size)
    keys = jax.random.split(key, 16)

    def u(k, shape):
        return jax.random.uniform(k, shape, jnp.float32, minval=-stdv, maxval=stdv)

    Ws = u(keys[0], (hidden_size, input_size))
    Wr = u(keys[1], (hidden_size, input_size))
    Wz = u(keys[2], (hidden_size, input_size))
    Us = u(keys[3], (hidden_size, hidden_size))
    Ur = u(keys[4], (hidden_size, hidden_size))
    Uz = u(keys[5], (hidden_size, hidden_size))
    Cs = u(keys[6], (hidden_size, ctx_size))
    Cr = u(keys[7], (hidden_size, ctx_size))
    Cz = u(keys[8], (hidden_size, ctx_size))
    bs = u(keys[9], (hidden_size,))
    br = u(keys[10], (hidden_size,))
    bz = u(keys[11], (hidden_size,))

    y = jax.random.normal(keys[12], (batch, input_size), jnp.float32)
    ctx = jax.random.normal(keys[13], (batch, ctx_size), jnp.float32)
    last_s = jax.random.normal(keys[14], (batch, hidden_size), jnp.float32)

    params = (Ws, Wr, Wz, Us, Ur, Uz, Cs, Cr, Cz, bs, br, bz)

    # Pack weights ONCE (outside the per-timestep path); reuse for every call.
    # For production decoders pass matmul_dtype=jnp.bfloat16 (f32 accumulation
    # is kept inside the kernel via preferred_element_type).
    packed = pack_decoder_gru_weights(*params)

    out = decoder_gru_cell_forward(y, ctx, last_s, packed)
    out = jax.block_until_ready(out)

    ref = _reference_forward(y, ctx, last_s, *params)
    assert out.shape == (batch, hidden_size)
    # Tolerance covers the EUP approx-reciprocal sigmoid; all math is f32.
    assert jnp.allclose(out, ref, atol=5e-3, rtol=5e-3), "mismatch vs reference GRU cell"

    print("KERNEL_OK")
</pallas_src>

<mosaic_0001>
module attributes {stable_mosaic.version = 11 : i64} {
  func.func @kernel(%arg0: i32, %arg1: memref<8x32xf32, #tpu.memory_space<vmem>>, %arg2: memref<8x48xf32, #tpu.memory_space<vmem>>, %arg3: memref<8x32xf32, #tpu.memory_space<vmem>>, %arg4: memref<32x384xf32, #tpu.memory_space<vmem>>, %arg5: memref<48x384xf32, #tpu.memory_space<vmem>>, %arg6: memref<32x384xf32, #tpu.memory_space<vmem>>, %arg7: memref<128x128xf32, #tpu.memory_space<vmem>>, %arg8: memref<1x384xf32, #tpu.memory_space<vmem>>, %arg9: memref<32x128xf32, #tpu.memory_space<vmem>>, %arg10: memref<8x128xf32, #tpu.memory_space<vmem>>) attributes {dimension_semantics = [#tpu.dimension_semantics<parallel>], iteration_bounds = array<i64: 1>, scalar_prefetch = 0 : i64, scratch_operands = 0 : i64, tpu.core_type = #tpu.core_type<tc>, window_params = [{transform_indices = @transform_0, window_bounds = array<i64: 8, 32>}, {transform_indices = @transform_1, window_bounds = array<i64: 8, 48>}, {transform_indices = @transform_2, window_bounds = array<i64: 8, 32>}, {pipeline_mode = #tpu.pipeline_mode<synchronous>, transform_indices = @transform_3, window_bounds = array<i64: 32, 384>}, {pipeline_mode = #tpu.pipeline_mode<synchronous>, transform_indices = @transform_4, window_bounds = array<i64: 48, 384>}, {pipeline_mode = #tpu.pipeline_mode<synchronous>, transform_indices = @transform_5, window_bounds = array<i64: 32, 384>}, {pipeline_mode = #tpu.pipeline_mode<synchronous>, transform_indices = @transform_6, window_bounds = array<i64: 128, 128>}, {pipeline_mode = #tpu.pipeline_mode<synchronous>, transform_indices = @transform_7, window_bounds = array<i64: 1, 384>}, {pipeline_mode = #tpu.pipeline_mode<synchronous>, transform_indices = @transform_8, window_bounds = array<i64: 32, 128>}, {transform_indices = @transform_9, window_bounds = array<i64: 8, 128>}]} {
    %c0 = arith.constant 0 : index
    %c0_0 = arith.constant 0 : index
    %0 = vector.load %arg1[%c0, %c0_0] : memref<8x32xf32, #tpu.memory_space<vmem>>, vector<8x32xf32>
    %c0_1 = arith.constant 0 : index
    %c0_2 = arith.constant 0 : index
    %1 = vector.load %arg2[%c0_1, %c0_2] : memref<8x48xf32, #tpu.memory_space<vmem>>, vector<8x48xf32>
    %c0_3 = arith.constant 0 : index
    %c0_4 = arith.constant 0 : index
    %2 = vector.load %arg3[%c0_3, %c0_4] : memref<8x32xf32, #tpu.memory_space<vmem>>, vector<8x32xf32>
    %c0_5 = arith.constant 0 : index
    %c0_6 = arith.constant 0 : index
    %3 = vector.load %arg4[%c0_5, %c0_6] : memref<32x384xf32, #tpu.memory_space<vmem>>, vector<32x384xf32>
    %cst = arith.constant dense<0.000000e+00> : vector<8x384xf32>
    %4 = tpu.matmul %0, %3, %cst {dimension_numbers = #tpu.dot_dimension_numbers<[1], [0], [0], [1], [0, 0, 1, 1], [], []>} : vector<8x32xf32>, vector<32x384xf32>, vector<8x384xf32> -> vector<8x384xf32>
    %c0_7 = arith.constant 0 : index
    %c0_8 = arith.constant 0 : index
    %5 = vector.load %arg5[%c0_7, %c0_8] : memref<48x384xf32, #tpu.memory_space<vmem>>, vector<48x384xf32>
    %cst_9 = arith.constant dense<0.000000e+00> : vector<8x384xf32>
    %6 = tpu.matmul %1, %5, %cst_9 {dimension_numbers = #tpu.dot_dimension_numbers<[1], [0], [0], [1], [0, 0, 1, 1], [], []>} : vector<8x48xf32>, vector<48x384xf32>, vector<8x384xf32> -> vector<8x384xf32>
    %7 = arith.addf %4, %6 : vector<8x384xf32>
    %c0_10 = arith.constant 0 : index
    %c0_11 = arith.constant 0 : index
    %8 = vector.load %arg6[%c0_10, %c0_11] : memref<32x384xf32, #tpu.memory_space<vmem>>, vector<32x384xf32>
    %cst_12 = arith.constant dense<0.000000e+00> : vector<8x384xf32>
    %9 = tpu.matmul %2, %8, %cst_12 {dimension_numbers = #tpu.dot_dimension_numbers<[1], [0], [0], [1], [0, 0, 1, 1], [], []>} : vector<8x32xf32>, vector<32x384xf32>, vector<8x384xf32> -> vector<8x384xf32>
    %10 = arith.addf %7, %9 : vector<8x384xf32>
    %c0_13 = arith.constant 0 : index
    %c0_14 = arith.constant 0 : index
    %11 = vector.load %arg8[%c0_13, %c0_14] : memref<1x384xf32, #tpu.memory_space<vmem>>, vector<1x384xf32>
    %12 = vector.broadcast %11 : vector<1x384xf32> to vector<8x384xf32>
    %13 = arith.addf %10, %12 : vector<8x384xf32>
    %14 = vector.extract_strided_slice %13 {offsets = [0, 0], sizes = [8, 128], strides = [1, 1]} : vector<8x384xf32> to vector<8x128xf32>
    %cst_15 = arith.constant 0.000000e+00 : f32
    %15 = vector.broadcast %cst_15 : f32 to vector<8x128xf32>
    %16 = arith.subf %15, %14 : vector<8x128xf32>
    %17 = math.exp %16 : vector<8x128xf32>
    %cst_16 = arith.constant 1.000000e+00 : f32
    %18 = vector.broadcast %cst_16 : f32 to vector<8x128xf32>
    %19 = arith.addf %18, %17 : vector<8x128xf32>
    %20 = tpu.reciprocal %19 {approx = true} : vector<8x128xf32> -> vector<8x128xf32>
    %21 = vector.extract_strided_slice %13 {offsets = [0, 128], sizes = [8, 128], strides = [1, 1]} : vector<8x384xf32> to vector<8x128xf32>
    %cst_17 = arith.constant 0.000000e+00 : f32
    %22 = vector.broadcast %cst_17 : f32 to vector<8x128xf32>
    %23 = arith.subf %22, %21 : vector<8x128xf32>
    %24 = math.exp %23 : vector<8x128xf32>
    %cst_18 = arith.constant 1.000000e+00 : f32
    %25 = vector.broadcast %cst_18 : f32 to vector<8x128xf32>
    %26 = arith.addf %25, %24 : vector<8x128xf32>
    %27 = tpu.reciprocal %26 {approx = true} : vector<8x128xf32> -> vector<8x128xf32>
    %c0_19 = arith.constant 0 : index
    %c0_20 = arith.constant 0 : index
    %28 = vector.load %arg9[%c0_19, %c0_20] : memref<32x128xf32, #tpu.memory_space<vmem>>, vector<32x128xf32>
    %cst_21 = arith.constant dense<0.000000e+00> : vector<8x128xf32>
    %29 = tpu.matmul %2, %28, %cst_21 {dimension_numbers = #tpu.dot_dimension_numbers<[1], [0], [0], [1], [0, 0, 1, 1], [], []>} : vector<8x32xf32>, vector<32x128xf32>, vector<8x128xf32> -> vector<8x128xf32>
    %30 = arith.mulf %29, %27 : vector<8x128xf32>
    %31 = vector.extract_strided_slice %13 {offsets = [0, 256], sizes = [8, 128], strides = [1, 1]} : vector<8x384xf32> to vector<8x128xf32>
    %c0_22 = arith.constant 0 : index
    %c0_23 = arith.constant 0 : index
    %32 = vector.load %arg7[%c0_22, %c0_23] : memref<128x128xf32, #tpu.memory_space<vmem>>, vector<128x128xf32>
    %cst_24 = arith.constant dense<0.000000e+00> : vector<8x128xf32>
    %33 = tpu.matmul %30, %32, %cst_24 {dimension_numbers = #tpu.dot_dimension_numbers<[1], [0], [0], [1], [0, 0, 1, 1], [], []>} : vector<8x128xf32>, vector<128x128xf32>, vector<8x128xf32> -> vector<8x128xf32>
    %34 = arith.addf %31, %33 : vector<8x128xf32>
    %cst_25 = arith.constant 0.000000e+00 : f32
    %35 = vector.broadcast %cst_25 : f32 to vector<8x128xf32>
    %36 = arith.maximumf %34, %35 : vector<8x128xf32>
    %37 = arith.subf %36, %29 : vector<8x128xf32>
    %38 = arith.mulf %20, %37 : vector<8x128xf32>
    %39 = arith.addf %29, %38 : vector<8x128xf32>
    %c0_26 = arith.constant 0 : index
    %c0_27 = arith.constant 0 : index
    %40 = vector.load %arg10[%c0_26, %c0_27] : memref<8x128xf32, #tpu.memory_space<vmem>>, vector<8x128xf32>
    tpu.vector_store %arg10[%c0_26, %c0_27], %39 {strides = array<i32>} : memref<8x128xf32, #tpu.memory_space<vmem>>, vector<8x128xf32>,
    return
  }
  func.func @transform_0(%arg0: i32) -> (i32, i32) {
    %c0_i32 = arith.constant 0 : i32
    %c0_i32_0 = arith.constant 0 : i32
    return %arg0, %c0_i32 : i32, i32
  }
  func.func @transform_1(%arg0: i32) -> (i32, i32) {
    %c0_i32 = arith.constant 0 : i32
    %c0_i32_0 = arith.constant 0 : i32
    return %arg0, %c0_i32 : i32, i32
  }
  func.func @transform_2(%arg0: i32) -> (i32, i32) {
    %c0_i32 = arith.constant 0 : i32
    %c0_i32_0 = arith.constant 0 : i32
    return %arg0, %c0_i32 : i32, i32
  }
  func.func @transform_3(%arg0: i32) -> (i32, i32) {
    %c0_i32 = arith.constant 0 : i32
    %c0_i32_0 = arith.constant 0 : i32
    %c0_i32_1 = arith.constant 0 : i32
    return %c0_i32, %c0_i32_0 : i32, i32
  }
  func.func @transform_4(%arg0: i32) -> (i32, i32) {
    %c0_i32 = arith.constant 0 : i32
    %c0_i32_0 = arith.constant 0 : i32
    %c0_i32_1 = arith.constant 0 : i32
    return %c0_i32, %c0_i32_0 : i32, i32
  }
  func.func @transform_5(%arg0: i32) -> (i32, i32) {
    %c0_i32 = arith.constant 0 : i32
    %c0_i32_0 = arith.constant 0 : i32
    %c0_i32_1 = arith.constant 0 : i32
    return %c0_i32, %c0_i32_0 : i32, i32
  }
  func.func @transform_6(%arg0: i32) -> (i32, i32) {
    %c0_i32 = arith.constant 0 : i32
    %c0_i32_0 = arith.constant 0 : i32
    %c0_i32_1 = arith.constant 0 : i32
    return %c0_i32, %c0_i32_0 : i32, i32
  }
  func.func @transform_7(%arg0: i32) -> (i32, i32) {
    %c0_i32 = arith.constant 0 : i32
    %c0_i32_0 = arith.constant 0 : i32
    %c0_i32_1 = arith.constant 0 : i32
    return %c0_i32, %c0_i32_0 : i32, i32
  }
  func.func @transform_8(%arg0: i32) -> (i32, i32) {
    %c0_i32 = arith.constant 0 : i32
    %c0_i32_0 = arith.constant 0 : i32
    %c0_i32_1 = arith.constant 0 : i32
    return %c0_i32, %c0_i32_0 : i32, i32
  }
  func.func @transform_9(%arg0: i32) -> (i32, i32) {
    %c0_i32 = arith.constant 0 : i32
    %c0_i32_0 = arith.constant 0 : i32
    return %arg0, %c0_i32 : i32, i32
  }
}

</mosaic_0001>

<llo_original>
// kernel: tpu_custom_call.1
$region0: #{tpu_custom_call.1}
  #allocation0 [shape = 'u32[]', space=smem, size = 0x4, offset = 0x4, fixed_abs, tag = 'smem constant byte address 0x4 - core index']
  #allocation1 [shape = 'u32[144,128]{1,0:T(1,128)}', space=vmem, size = 0x12000, scoped, tag = 'internal scratch']
  %s0 = inlined_call_operand.hbm [shape: f32[8,32], index: 0, kind: input, shape index: {}]
  %s1 = inlined_call_operand.hbm [shape: f32[8,48], index: 1, kind: input, shape index: {}]
  %s2 = inlined_call_operand.hbm [shape: f32[8,32], index: 2, kind: input, shape index: {}]
  %s3 = inlined_call_operand.hbm [shape: f32[32,384], index: 3, kind: input, shape index: {}]
  %s4 = inlined_call_operand.hbm [shape: f32[48,384], index: 4, kind: input, shape index: {}]
  %s5 = inlined_call_operand.hbm [shape: f32[32,384], index: 5, kind: input, shape index: {}]
  %s6 = inlined_call_operand.hbm [shape: f32[128,128], index: 6, kind: input, shape index: {}]
  %s7 = inlined_call_operand.vmem [shape: f32[1,384], index: 7, kind: input, shape index: {}]
  %s8 = inlined_call_operand.hbm [shape: f32[32,128], index: 8, kind: input, shape index: {}]
  %s9 = inlined_call_operand.hbm [shape: f32[8,128], index: 9, kind: output, shape index: {}]
  %s10 = sld [smem:[#allocation0]]
  $region78: #{tpu_custom_call.1} parent=0
    _
  %s12 = ssub.s32 1, %s10
  %s13 = scalar_select 0, %s12, %s10
  $region1: #{tpu_custom_call.1} parent=0
    #allocation2 [shape = 'u8[4096]{0}', space=vmem, size = 0x1000, scoped, tag = 'input window, operand 0, single buffered']
    #allocation3 [shape = 's32[1]{0}', space=sflag, size = 0x4, scoped, tag = 'scoped memory for tpu_custom_call.1']
    #allocation4 [shape = 's32[1]{0}', space=sflag, size = 0x4, scoped, tag = 'scoped memory for tpu_custom_call.1']
    #allocation5 [shape = 'u8[4096]{0}', space=vmem, size = 0x1000, scoped, tag = 'input window, operand 1, single buffered']
    #allocation6 [shape = 's32[1]{0}', space=sflag, size = 0x4, scoped, tag = 'scoped memory for tpu_custom_call.1']
    #allocation7 [shape = 'u8[4096]{0}', space=vmem, size = 0x1000, scoped, tag = 'input window, operand 2, single buffered']
    #allocation8 [shape = 'u8[49152]{0}', space=vmem, size = 0xc000, scoped, tag = 'input window, operand 3, single buffered']
    #allocation9 [shape = 's32[1]{0}', space=sflag, size = 0x4, scoped, tag = 'scoped memory for tpu_custom_call.1']
    #allocation10 [shape = 'u8[73728]{0}', space=vmem, size = 0x12000, scoped, tag = 'input window, operand 4, single buffered']
    #allocation11 [shape = 'u8[49152]{0}', space=vmem, size = 0xc000, scoped, tag = 'input window, operand 5, single buffered']
    #allocation12 [shape = 's32[1]{0}', space=sflag, size = 0x4, scoped, tag = 'scoped memory for tpu_custom_call.1']
    #allocation13 [shape = 'u8[65536]{0}', space=vmem, size = 0x10000, scoped, tag = 'input window, operand 6, single buffered']
    #allocation14 [shape = 'u8[16384]{0}', space=vmem, size = 0x4000, scoped, tag = 'input window, operand 8, single buffered']
    #allocation15 [shape = 's32[1]{0}', space=sflag, size = 0x4, scoped, tag = 'scoped memory for tpu_custom_call.1']
    #allocation16 [shape = 'u8[4096]{0}', space=vmem, size = 0x1000, scoped, tag = 'output window, operand 0, single buffered']
    %14 = vsyncpa [#allocation3], 0
    %15 = vsyncpa [#allocation6], 0
    %16 = vsyncpa [#allocation9], 0
    %17 = vsyncpa [#allocation12], 0
    %18 = vsyncpa [#allocation15], 0
    %19 = vsyncpa [#allocation4], 0
    // Predicated region
    $region2: #{tpu_custom_call.1} parent=1 // pred_check
      _
    $region3: #{tpu_custom_call.1} parent=1 // pred_check_branch
      %21 = sbr.rel (0) target = $region5
    $region4: #{tpu_custom_call.1} parent=1 // pred_region
      %s23 = ssub.s32 128, 128
      %24 = vsyncadd [#allocation3], %s23
      %s26 = sshll.u32 [#allocation2], 4
      %s27 = int_to_ptr.vmem [resolvable:$true] %s26
      %29 = dma.hbm_to_vmem [thread:$0]  %s0, 128, %s27, [#allocation3]
    $region5: #{tpu_custom_call.1} parent=1 // pred_fallthru
      _
    // Predicated region
    $region6: #{tpu_custom_call.1} parent=1 // pred_check
      _
    $region7: #{tpu_custom_call.1} parent=1 // pred_check_branch
      %31 = sbr.rel (0) target = $region9
    $region8: #{tpu_custom_call.1} parent=1 // pred_region
      %s33 = ssub.s32 128, 128
      %34 = vsyncadd [#allocation6], %s33
      %s36 = sshll.u32 [#allocation5], 4
      %s37 = int_to_ptr.vmem [resolvable:$true] %s36
      %39 = dma.hbm_to_vmem [thread:$0]  %s1, 128, %s37, [#allocation6]
    $region9: #{tpu_custom_call.1} parent=1 // pred_fallthru
      _
    // Predicated region
    $region10: #{tpu_custom_call.1} parent=1 // pred_check
      _
    $region11: #{tpu_custom_call.1} parent=1 // pred_check_branch
      %41 = sbr.rel (0) target = $region13
    $region12: #{tpu_custom_call.1} parent=1 // pred_region
      %s43 = ssub.s32 128, 128
      %44 = vsyncadd [#allocation6], %s43
      %s46 = sshll.u32 [#allocation7], 4
      %s47 = int_to_ptr.vmem [resolvable:$true] %s46
      %49 = dma.hbm_to_vmem [thread:$0]  %s2, 128, %s47, [#allocation6]
    $region13: #{tpu_custom_call.1} parent=1 // pred_fallthru
      _
    // Predicated region
    $region14: #{tpu_custom_call.1} parent=1 // pred_check
      _
    $region15: #{tpu_custom_call.1} parent=1 // pred_check_branch
      %51 = sbr.rel (0) target = $region17
    $region16: #{tpu_custom_call.1} parent=1 // pred_region
      %s53 = ssub.s32 1536, 1536
      %54 = vsyncadd [#allocation9], %s53
      %s55 = sshll.u32 [#allocation8], 4
      %s56 = int_to_ptr.vmem [resolvable:$true] %s55
      %61 = dma.hbm_to_vmem [thread:$0]  %s3, 1536, %s56, [#allocation9], 384, 384, 24
    $region17: #{tpu_custom_call.1} parent=1 // pred_fallthru
      _
    // Predicated region
    $region18: #{tpu_custom_call.1} parent=1 // pred_check
      _
    $region19: #{tpu_custom_call.1} parent=1 // pred_check_branch
      %63 = sbr.rel (0) target = $region21
    $region20: #{tpu_custom_call.1} parent=1 // pred_region
      %s65 = ssub.s32 2304, 2304
      %66 = vsyncadd [#allocation9], %s65
      %s67 = sshll.u32 [#allocation10], 4
      %s68 = int_to_ptr.vmem [resolvable:$true] %s67
      %73 = dma.hbm_to_vmem [thread:$0]  %s4, 2304, %s68, [#allocation9], 384, 384, 24
    $region21: #{tpu_custom_call.1} parent=1 // pred_fallthru
      _
    // Predicated region
    $region22: #{tpu_custom_call.1} parent=1 // pred_check
      _
    $region23: #{tpu_custom_call.1} parent=1 // pred_check_branch
      %75 = sbr.rel (0) target = $region25
    $region24: #{tpu_custom_call.1} parent=1 // pred_region
      %s77 = ssub.s32 1536, 1536
      %78 = vsyncadd [#allocation12], %s77
      %s79 = sshll.u32 [#allocation11], 4
      %s80 = int_to_ptr.vmem [resolvable:$true] %s79
      %85 = dma.hbm_to_vmem [thread:$0]  %s5, 1536, %s80, [#allocation12], 384, 384, 24
    $region25: #{tpu_custom_call.1} parent=1 // pred_fallthru
      _
    // Predicated region
    $region26: #{tpu_custom_call.1} parent=1 // pred_check
      _
    $region27: #{tpu_custom_call.1} parent=1 // pred_check_branch
      %87 = sbr.rel (0) target = $region29
    $region28: #{tpu_custom_call.1} parent=1 // pred_region
      %s89 = ssub.s32 2048, 2048
      %90 = vsyncadd [#allocation12], %s89
      %s91 = sshll.u32 [#allocation13], 4
      %s92 = int_to_ptr.vmem [resolvable:$true] %s91
      %97 = dma.hbm_to_vmem [thread:$0]  %s6, 2048, %s92, [#allocation12], 128, 128, 8
    $region29: #{tpu_custom_call.1} parent=1 // pred_fallthru
      _
    // Predicated region
    $region30: #{tpu_custom_call.1} parent=1 // pred_check
      _
    $region31: #{tpu_custom_call.1} parent=1 // pred_check_branch
      %99 = sbr.rel (0) target = $region33
    $region32: #{tpu_custom_call.1} parent=1 // pred_region
      _
    $region33: #{tpu_custom_call.1} parent=1 // pred_fallthru
      _
    // Predicated region
    $region34: #{tpu_custom_call.1} parent=1 // pred_check
      _
    $region35: #{tpu_custom_call.1} parent=1 // pred_check_branch
      %101 = sbr.rel (0) target = $region37
    $region36: #{tpu_custom_call.1} parent=1 // pred_region
      %s103 = ssub.s32 512, 512
      %104 = vsyncadd [#allocation15], %s103
      %s105 = sshll.u32 [#allocation14], 4
      %s106 = int_to_ptr.vmem [resolvable:$true] %s105
      %111 = dma.hbm_to_vmem [thread:$0]  %s8, 512, %s106, [#allocation15], 128, 128, 8
    $region37: #{tpu_custom_call.1} parent=1 // pred_fallthru
      _
    // Predicated region
    $region38: #{tpu_custom_call.1} parent=1 // pred_check
      _
    $region39: #{tpu_custom_call.1} parent=1 // pred_check_branch
      %113 = sbr.rel (0) target = $region41
    $region40: #{tpu_custom_call.1} parent=1 // pred_region
      %114 = dma.done [#allocation3], 128
    $region41: #{tpu_custom_call.1} parent=1 // pred_fallthru
      _
    // Predicated region
    $region42: #{tpu_custom_call.1} parent=1 // pred_check
      _
    $region43: #{tpu_custom_call.1} parent=1 // pred_check_branch
      %116 = sbr.rel (0) target = $region45
    $region44: #{tpu_custom_call.1} parent=1 // pred_region
      %117 = dma.done [#allocation6], 128
    $region45: #{tpu_custom_call.1} parent=1 // pred_fallthru
      _
    // Predicated region
    $region46: #{tpu_custom_call.1} parent=1 // pred_check
      _
    $region47: #{tpu_custom_call.1} parent=1 // pred_check_branch
      %119 = sbr.rel (0) target = $region49
    $region48: #{tpu_custom_call.1} parent=1 // pred_region
      %120 = dma.done [#allocation6], 128
    $region49: #{tpu_custom_call.1} parent=1 // pred_fallthru
      _
    // Predicated region
    $region50: #{tpu_custom_call.1} parent=1 // pred_check
      _
    $region51: #{tpu_custom_call.1} parent=1 // pred_check_branch
      %122 = sbr.rel (0) target = $region53
    $region52: #{tpu_custom_call.1} parent=1 // pred_region
      %123 = dma.done [#allocation9], 1536
    $region53: #{tpu_custom_call.1} parent=1 // pred_fallthru
      _
    // Predicated region
    $region54: #{tpu_custom_call.1} parent=1 // pred_check
      _
    $region55: #{tpu_custom_call.1} parent=1 // pred_check_branch
      %125 = sbr.rel (0) target = $region57
    $region56: #{tpu_custom_call.1} parent=1 // pred_region
      %126 = dma.done [#allocation9], 2304
    $region57: #{tpu_custom_call.1} parent=1 // pred_fallthru
      _
    // Predicated region
    $region58: #{tpu_custom_call.1} parent=1 // pred_check
      _
    $region59: #{tpu_custom_call.1} parent=1 // pred_check_branch
      %128 = sbr.rel (0) target = $region61
    $region60: #{tpu_custom_call.1} parent=1 // pred_region
      %129 = dma.done [#allocation12], 1536
    $region61: #{tpu_custom_call.1} parent=1 // pred_fallthru
      _
    // Predicated region
    $region62: #{tpu_custom_call.1} parent=1 // pred_check
      _
    $region63: #{tpu_custom_call.1} parent=1 // pred_check_branch
      %131 = sbr.rel (0) target = $region65
    $region64: #{tpu_custom_call.1} parent=1 // pred_region
      %132 = dma.done [#allocation12], 2048
    $region65: #{tpu_custom_call.1} parent=1 // pred_fallthru
      _
    // Predicated region
    $region66: #{tpu_custom_call.1} parent=1 // pred_check
      _
    $region67: #{tpu_custom_call.1} parent=1 // pred_check_branch
      %134 = sbr.rel (0) target = $region69
    $region68: #{tpu_custom_call.1} parent=1 // pred_region
      %135 = dma.done [#allocation15], 512
    $region69: #{tpu_custom_call.1} parent=1 // pred_fallthru
      _
    %v136 = vld [vmem:[#allocation2] sm:$0xff]
    %v137 = vld [vmem:[#allocation5] sm:$0xff]
    %v138 = vld [vmem:[#allocation7] sm:$0xff]
    %v139 = vld [vmem:[#allocation8] sm:$0xff]
    %v140 = vld [vmem:[#allocation8 + $0x8] sm:$0xff]
    %v141 = vld [vmem:[#allocation8 + $0x10] sm:$0xff]
    %v142 = vld [vmem:[#allocation8 + $0x18] sm:$0xff]
    %v143 = vld [vmem:[#allocation8 + $0x20] sm:$0xff]
    %v144 = vld [vmem:[#allocation8 + $0x28] sm:$0xff]
    %v145 = vld [vmem:[#allocation8 + $0x30] sm:$0xff]
    %v146 = vld [vmem:[#allocation8 + $0x38] sm:$0xff]
    %v147 = vld [vmem:[#allocation8 + $0x40] sm:$0xff]
    %v148 = vld [vmem:[#allocation8 + $0x48] sm:$0xff]
    %v149 = vld [vmem:[#allocation8 + $0x50] sm:$0xff]
    %v150 = vld [vmem:[#allocation8 + $0x58] sm:$0xff]
    %v151 = vld [vmem:[#allocation10] sm:$0xff]
    %v152 = vld [vmem:[#allocation10 + $0x8] sm:$0xff]
    %v153 = vld [vmem:[#allocation10 + $0x10] sm:$0xff]
    %v154 = vld [vmem:[#allocation10 + $0x18] sm:$0xff]
    %v155 = vld [vmem:[#allocation10 + $0x20] sm:$0xff]
    %v156 = vld [vmem:[#allocation10 + $0x28] sm:$0xff]
    %v157 = vld [vmem:[#allocation10 + $0x30] sm:$0xff]
    %v158 = vld [vmem:[#allocation10 + $0x38] sm:$0xff]
    %v159 = vld [vmem:[#allocation10 + $0x40] sm:$0xff]
    %v160 = vld [vmem:[#allocation10 + $0x48] sm:$0xff]
    %v161 = vld [vmem:[#allocation10 + $0x50] sm:$0xff]
    %v162 = vld [vmem:[#allocation10 + $0x58] sm:$0xff]
    %v163 = vld [vmem:[#allocation10 + $0x60] sm:$0xff]
    %v164 = vld [vmem:[#allocation10 + $0x68] sm:$0xff]
    %v165 = vld [vmem:[#allocation10 + $0x70] sm:$0xff]
    %v166 = vld [vmem:[#allocation10 + $0x78] sm:$0xff]
    %v167 = vld [vmem:[#allocation10 + $0x80] sm:$0xff]
    %v168 = vld [vmem:[#allocation10 + $0x88] sm:$0xff]
    %vm169 = vcmask 392192
    %v171 = vsel %vm169, %v137, 0
    %173 = vmatprep.subr.mxu0 %v152
    %174 = vmatpush1.msra.mxu0 %v151
    %175 = vmatprep.subr.mxu0 %v155
    %176 = vmatpush1.msra.mxu0 %v154
    %177 = vmatprep.subr.mxu0 %v158
    %178 = vmatpush1.msra.mxu0 %v157
    %179 = vmatprep.subr.mxu0 %v161
    %180 = vmatpush1.msra.mxu0 %v160
    %181 = vmatprep.subr.mxu0 %v164
    %182 = vmatpush1.msra.mxu0 %v163
    %183 = vmatprep.subr.mxu0 %v167
    %184 = vmatpush1.msra.mxu0 %v166
    %185 = vmatprep.subr.mxu0 0.0
    %186 = vmatpush1.msra.mxu0 0.0
    %187 = vmatprep.subr.mxu0 0.0
    %188 = vmatpush1.msra.mxu0 0.0
    %189 = vmatprep.subr.mxu0 0.0
    %190 = vmatpush1.msra.mxu0 0.0
    %191 = vmatprep.subr.mxu0 0.0
    %192 = vmatpush1.msra.mxu0 0.0
    %193 = vmatprep.subr.mxu0 0.0
    %194 = vmatpush1.msra.mxu0 0.0
    %195 = vmatprep.subr.mxu0 0.0
    %196 = vmatpush1.msra.mxu0 0.0
    %197 = vmatprep.subr.mxu0 0.0
    %198 = vmatpush1.msra.mxu0 0.0
    %199 = vmatprep.subr.mxu0 0.0
    %200 = vmatpush1.msra.mxu0 0.0
    %201 = vmatprep.subr.mxu0 0.0
    %202 = vmatpush1.msra.mxu0 0.0
    %203 = vmatprep.subr.mxu0 0.0
    %204 = vmatpush1.msra.mxu0 0.0
    %205 = vmatprep.subr.mxu0 0.0
    %206 = vmatpush1.msra.mxu0 0.0
    %207 = vmatprep.subr.mxu0 0.0
    %208 = vmatpush1.msra.mxu0 0.0
    %209 = vmatprep.subr.mxu0 0.0
    %210 = vmatpush1.msra.mxu0 0.0
    %211 = vmatprep.subr.mxu0 0.0
    %212 = vmatpush1.msra.mxu0 0.0
    %213 = vmatprep.subr.mxu0 0.0
    %214 = vmatpush1.msra.mxu0 0.0
    %215 = vmatprep.subr.mxu0 0.0
    %216 = vmatpush1.msra.mxu0 0.0
    %217 = vmatprep.subr.mxu0 0.0
    %218 = vmatpush1.msra.mxu0 0.0
    %219 = vmatprep.subr.mxu0 0.0
    %220 = vmatpush1.msra.mxu0 0.0
    %221 = vmatprep.subr.mxu0 0.0
    %222 = vmatpush1.msra.mxu0 0.0
    %223 = vmatprep.subr.mxu0 0.0
    %224 = vmatpush1.msra.mxu0 0.0
    %225 = vmatprep.subr.mxu0 0.0
    %226 = vmatpush1.msra.mxu0 0.0
    %227 = vmatprep.subr.mxu0 0.0
    %228 = vmatpush1.msra.mxu0 0.0
    %229 = vmatprep.subr.mxu0 0.0
    %230 = vmatpush1.msra.mxu0 0.0
    %231 = vmatprep.subr.mxu0 0.0
    %232 = vmatpush1.msra.mxu0 0.0
    %233 = vmatprep.subr.mxu0 0.0
    %234 = vmatpush1.msra.mxu0 0.0
    %235 = vmatprep.subr.mxu0 0.0
    %236 = vmatpush1.msra.mxu0 0.0
    %237 = vmatprep.mubr.f32.mxu0 0.0
    %238 = vmatmul.mubr.f32.gmra.mrb[0].mxu0 %v171
    %v239 = vpop.f32.mrb[0].mxu0
    %v240 = vadd.f32 0.0, %v239
    %v241 = vpop.f32.mrb[0].mxu0
    %v242 = vadd.f32 0.0, %v241
    %243 = vdwg.mxu0
    %244 = vmatprep.subr.mxu0 0.0
    %245 = vmatpush1.msra.mxu0 %v153
    %246 = vmatprep.subr.mxu0 0.0
    %247 = vmatpush1.msra.mxu0 %v156
    %248 = vmatprep.subr.mxu0 0.0
    %249 = vmatpush1.msra.mxu0 %v159
    %250 = vmatprep.subr.mxu0 0.0
    %251 = vmatpush1.msra.mxu0 %v162
    %252 = vmatprep.subr.mxu0 0.0
    %253 = vmatpush1.msra.mxu0 %v165
    %254 = vmatprep.subr.mxu0 0.0
    %255 = vmatpush1.msra.mxu0 %v168
    %256 = vmatprep.subr.mxu0 0.0
    %257 = vmatpush1.msra.mxu0 0.0
    %258 = vmatprep.subr.mxu0 0.0
    %259 = vmatpush1.msra.mxu0 0.0
    %260 = vmatprep.subr.mxu0 0.0
    %261 = vmatpush1.msra.mxu0 0.0
    %262 = vmatprep.subr.mxu0 0.0
    %263 = vmatpush1.msra.mxu0 0.0
    %264 = vmatprep.subr.mxu0 0.0
    %265 = vmatpush1.msra.mxu0 0.0
    %266 = vmatprep.subr.mxu0 0.0
    %267 = vmatpush1.msra.mxu0 0.0
    %268 = vmatprep.subr.mxu0 0.0
    %269 = vmatpush1.msra.mxu0 0.0
    %270 = vmatprep.subr.mxu0 0.0
    %271 = vmatpush1.msra.mxu0 0.0
    %272 = vmatprep.subr.mxu0 0.0
    %273 = vmatpush1.msra.mxu0 0.0
    %274 = vmatprep.subr.mxu0 0.0
    %275 = vmatpush1.msra.mxu0 0.0
    %276 = vmatprep.subr.mxu0 0.0
    %277 = vmatpush1.msra.mxu0 0.0
    %278 = vmatprep.subr.mxu0 0.0
    %279 = vmatpush1.msra.mxu0 0.0
    %280 = vmatprep.subr.mxu0 0.0
    %281 = vmatpush1.msra.mxu0 0.0
    %282 = vmatprep.subr.mxu0 0.0
    %283 = vmatpush1.msra.mxu0 0.0
    %284 = vmatprep.subr.mxu0 0.0
    %285 = vmatpush1.msra.mxu0 0.0
    %286 = vmatprep.subr.mxu0 0.0
    %287 = vmatpush1.msra.mxu0 0.0
    %288 = vmatprep.subr.mxu0 0.0
    %289 = vmatpush1.msra.mxu0 0.0
    %290 = vmatprep.subr.mxu0 0.0
    %291 = vmatpush1.msra.mxu0 0.0
    %292 = vmatprep.subr.mxu0 0.0
    %293 = vmatpush1.msra.mxu0 0.0
    %294 = vmatprep.subr.mxu0 0.0
    %295 = vmatpush1.msra.mxu0 0.0
    %296 = vmatprep.subr.mxu0 0.0
    %297 = vmatpush1.msra.mxu0 0.0
    %298 = vmatprep.subr.mxu0 0.0
    %299 = vmatpush1.msra.mxu0 0.0
    %300 = vmatprep.subr.mxu0 0.0
    %301 = vmatpush1.msra.mxu0 0.0
    %302 = vmatprep.subr.mxu0 0.0
    %303 = vmatpush1.msra.mxu0 0.0
    %304 = vmatprep.subr.mxu0 0.0
    %305 = vmatpush1.msra.mxu0 0.0
    %306 = vmatprep.subr.mxu0 0.0
    %307 = vmatpush1.msra.mxu0 0.0
    %308 = vmatprep.mubr.f32.mxu0 0.0
    %309 = vmatmul.mubr.f32.gmra.mrb[0].mxu0 %v171
    %v310 = vpop.f32.mrb[0].mxu0
    %v311 = vadd.f32 0.0, %v310
    %v312 = vpop.f32.mrb[0].mxu0
    %313 = vdwg.mxu0
    %vm314 = vcmask 261120
    %v316 = vsel %vm314, %v136, 0
    %318 = vmatprep.subr.mxu0 %v140
    %319 = vmatpush1.msra.mxu0 %v139
    %320 = vmatprep.subr.mxu0 %v143
    %321 = vmatpush1.msra.mxu0 %v142
    %322 = vmatprep.subr.mxu0 %v146
    %323 = vmatpush1.msra.mxu0 %v145
    %324 = vmatprep.subr.mxu0 %v149
    %325 = vmatpush1.msra.mxu0 %v148
    %326 = vmatprep.subr.mxu0 0.0
    %327 = vmatpush1.msra.mxu0 0.0
    %328 = vmatprep.subr.mxu0 0.0
    %329 = vmatpush1.msra.mxu0 0.0
    %330 = vmatprep.subr.mxu0 0.0
    %331 = vmatpush1.msra.mxu0 0.0
    %332 = vmatprep.subr.mxu0 0.0
    %333 = vmatpush1.msra.mxu0 0.0
    %334 = vmatprep.subr.mxu0 0.0
    %335 = vmatpush1.msra.mxu0 0.0
    %336 = vmatprep.subr.mxu0 0.0
    %337 = vmatpush1.msra.mxu0 0.0
    %338 = vmatprep.subr.mxu0 0.0
    %339 = vmatpush1.msra.mxu0 0.0
    %340 = vmatprep.subr.mxu0 0.0
    %341 = vmatpush1.msra.mxu0 0.0
    %342 = vmatprep.subr.mxu0 0.0
    %343 = vmatpush1.msra.mxu0 0.0
    %344 = vmatprep.subr.mxu0 0.0
    %345 = vmatpush1.msra.mxu0 0.0
    %346 = vmatprep.subr.mxu0 0.0
    %347 = vmatpush1.msra.mxu0 0.0
    %348 = vmatprep.subr.mxu0 0.0
    %349 = vmatpush1.msra.mxu0 0.0
    %350 = vmatprep.subr.mxu0 0.0
    %351 = vmatpush1.msra.mxu0 0.0
    %352 = vmatprep.subr.mxu0 0.0
    %353 = vmatpush1.msra.mxu0 0.0
    %354 = vmatprep.subr.mxu0 0.0
    %355 = vmatpush1.msra.mxu0 0.0
    %356 = vmatprep.subr.mxu0 0.0
    %357 = vmatpush1.msra.mxu0 0.0
    %358 = vmatprep.subr.mxu0 0.0
    %359 = vmatpush1.msra.mxu0 0.0
    %360 = vmatprep.subr.mxu0 0.0
    %361 = vmatpush1.msra.mxu0 0.0
    %362 = vmatprep.subr.mxu0 0.0
    %363 = vmatpush1.msra.mxu0 0.0
    %364 = vmatprep.subr.mxu0 0.0
    %365 = vmatpush1.msra.mxu0 0.0
    %366 = vmatprep.subr.mxu0 0.0
    %367 = vmatpush1.msra.mxu0 0.0
    %368 = vmatprep.subr.mxu0 0.0
    %369 = vmatpush1.msra.mxu0 0.0
    %370 = vmatprep.subr.mxu0 0.0
    %371 = vmatpush1.msra.mxu0 0.0
    %372 = vmatprep.subr.mxu0 0.0
    %373 = vmatpush1.msra.mxu0 0.0
    %374 = vmatprep.subr.mxu0 0.0
    %375 = vmatpush1.msra.mxu0 0.0
    %376 = vmatprep.subr.mxu0 0.0
    %377 = vmatpush1.msra.mxu0 0.0
    %378 = vmatprep.subr.mxu0 0.0
    %379 = vmatpush1.msra.mxu0 0.0
    %380 = vmatprep.subr.mxu0 0.0
    %381 = vmatpush1.msra.mxu0 0.0
    %382 = vmatprep.mubr.f32.mxu0 0.0
    %383 = vmatmul.mubr.f32.gmra.mrb[0].mxu0 %v316
    %v384 = vpop.f32.mrb[0].mxu0
    %v385 = vadd.f32 %v240, %v384
    %v386 = vpop.f32.mrb[0].mxu0
    %v387 = vadd.f32 %v242, %v386
    %388 = vdwg.mxu0
    %389 = vmatprep.subr.mxu0 0.0
    %390 = vmatpush1.msra.mxu0 %v141
    %391 = vmatprep.subr.mxu0 0.0
    %392 = vmatpush1.msra.mxu0 %v144
    %393 = vmatprep.subr.mxu0 0.0
    %394 = vmatpush1.msra.mxu0 %v147
    %395 = vmatprep.subr.mxu0 0.0
    %396 = vmatpush1.msra.mxu0 %v150
    %397 = vmatprep.subr.mxu0 0.0
    %398 = vmatpush1.msra.mxu0 0.0
    %399 = vmatprep.subr.mxu0 0.0
    %400 = vmatpush1.msra.mxu0 0.0
    %401 = vmatprep.subr.mxu0 0.0
    %402 = vmatpush1.msra.mxu0 0.0
    %403 = vmatprep.subr.mxu0 0.0
    %404 = vmatpush1.msra.mxu0 0.0
    %405 = vmatprep.subr.mxu0 0.0
    %406 = vmatpush1.msra.mxu0 0.0
    %407 = vmatprep.subr.mxu0 0.0
    %408 = vmatpush1.msra.mxu0 0.0
    %409 = vmatprep.subr.mxu0 0.0
    %410 = vmatpush1.msra.mxu0 0.0
    %411 = vmatprep.subr.mxu0 0.0
    %412 = vmatpush1.msra.mxu0 0.0
    %413 = vmatprep.subr.mxu0 0.0
    %414 = vmatpush1.msra.mxu0 0.0
    %415 = vmatprep.subr.mxu0 0.0
    %416 = vmatpush1.msra.mxu0 0.0
    %417 = vmatprep.subr.mxu0 0.0
    %418 = vmatpush1.msra.mxu0 0.0
    %419 = vmatprep.subr.mxu0 0.0
    %420 = vmatpush1.msra.mxu0 0.0
    %421 = vmatprep.subr.mxu0 0.0
    %422 = vmatpush1.msra.mxu0 0.0
    %423 = vmatprep.subr.mxu0 0.0
    %424 = vmatpush1.msra.mxu0 0.0
    %425 = vmatprep.subr.mxu0 0.0
    %426 = vmatpush1.msra.mxu0 0.0
    %427 = vmatprep.subr.mxu0 0.0
    %428 = vmatpush1.msra.mxu0 0.0
    %429 = vmatprep.subr.mxu0 0.0
    %430 = vmatpush1.msra.mxu0 0.0
    %431 = vmatprep.subr.mxu0 0.0
    %432 = vmatpush1.msra.mxu0 0.0
    %433 = vmatprep.subr.mxu0 0.0
    %434 = vmatpush1.msra.mxu0 0.0
    %435 = vmatprep.subr.mxu0 0.0
    %436 = vmatpush1.msra.mxu0 0.0
    %437 = vmatprep.subr.mxu0 0.0
    %438 = vmatpush1.msra.mxu0 0.0
    %439 = vmatprep.subr.mxu0 0.0
    %440 = vmatpush1.msra.mxu0 0.0
    %441 = vmatprep.subr.mxu0 0.0
    %442 = vmatpush1.msra.mxu0 0.0
    %443 = vmatprep.subr.mxu0 0.0
    %444 = vmatpush1.msra.mxu0 0.0
    %445 = vmatprep.subr.mxu0 0.0
    %446 = vmatpush1.msra.mxu0 0.0
    %447 = vmatprep.subr.mxu0 0.0
    %448 = vmatpush1.msra.mxu0 0.0
    %449 = vmatprep.subr.mxu0 0.0
    %450 = vmatpush1.msra.mxu0 0.0
    %451 = vmatprep.subr.mxu0 0.0
    %452 = vmatpush1.msra.mxu0 0.0
    %453 = vmatprep.mubr.f32.mxu0 0.0
    %454 = vmatmul.mubr.f32.gmra.mrb[0].mxu0 %v316
    %v455 = vpop.f32.mrb[0].mxu0
    %v456 = vadd.f32 %v311, %v455
    %v457 = vpop.f32.mrb[0].mxu0
    %458 = vdwg.mxu0
    %v459 = vld [vmem:[#allocation11] sm:$0xff]
    %v460 = vld [vmem:[#allocation11 + $0x8] sm:$0xff]
    %v461 = vld [vmem:[#allocation11 + $0x10] sm:$0xff]
    %v462 = vld [vmem:[#allocation11 + $0x18] sm:$0xff]
    %v463 = vld [vmem:[#allocation11 + $0x20] sm:$0xff]
    %v464 = vld [vmem:[#allocation11 + $0x28] sm:$0xff]
    %v465 = vld [vmem:[#allocation11 + $0x30] sm:$0xff]
    %v466 = vld [vmem:[#allocation11 + $0x38] sm:$0xff]
    %v467 = vld [vmem:[#allocation11 + $0x40] sm:$0xff]
    %v468 = vld [vmem:[#allocation11 + $0x48] sm:$0xff]
    %v469 = vld [vmem:[#allocation11 + $0x50] sm:$0xff]
    %v470 = vld [vmem:[#allocation11 + $0x58] sm:$0xff]
    %v472 = vsel %vm314, %v138, 0
    %474 = vmatprep.subr.mxu0 %v460
    %475 = vmatpush1.msra.mxu0 %v459
    %476 = vmatprep.subr.mxu0 %v463
    %477 = vmatpush1.msra.mxu0 %v462
    %478 = vmatprep.subr.mxu0 %v466
    %479 = vmatpush1.msra.mxu0 %v465
    %480 = vmatprep.subr.mxu0 %v469
    %481 = vmatpush1.msra.mxu0 %v468
    %482 = vmatprep.subr.mxu0 0.0
    %483 = vmatpush1.msra.mxu0 0.0
    %484 = vmatprep.subr.mxu0 0.0
    %485 = vmatpush1.msra.mxu0 0.0
    %486 = vmatprep.subr.mxu0 0.0
    %487 = vmatpush1.msra.mxu0 0.0
    %488 = vmatprep.subr.mxu0 0.0
    %489 = vmatpush1.msra.mxu0 0.0
    %490 = vmatprep.subr.mxu0 0.0
    %491 = vmatpush1.msra.mxu0 0.0
    %492 = vmatprep.subr.mxu0 0.0
    %493 = vmatpush1.msra.mxu0 0.0
    %494 = vmatprep.subr.mxu0 0.0
    %495 = vmatpush1.msra.mxu0 0.0
    %496 = vmatprep.subr.mxu0 0.0
    %497 = vmatpush1.msra.mxu0 0.0
    %498 = vmatprep.subr.mxu0 0.0
    %499 = vmatpush1.msra.mxu0 0.0
    %500 = vmatprep.subr.mxu0 0.0
    %501 = vmatpush1.msra.mxu0 0.0
    %502 = vmatprep.subr.mxu0 0.0
    %503 = vmatpush1.msra.mxu0 0.0
    %504 = vmatprep.subr.mxu0 0.0
    %505 = vmatpush1.msra.mxu0 0.0
    %506 = vmatprep.subr.mxu0 0.0
    %507 = vmatpush1.msra.mxu0 0.0
    %508 = vmatprep.subr.mxu0 0.0
    %509 = vmatpush1.msra.mxu0 0.0
    %510 = vmatprep.subr.mxu0 0.0
    %511 = vmatpush1.msra.mxu0 0.0
    %512 = vmatprep.subr.mxu0 0.0
    %513 = vmatpush1.msra.mxu0 0.0
    %514 = vmatprep.subr.mxu0 0.0
    %515 = vmatpush1.msra.mxu0 0.0
    %516 = vmatprep.subr.mxu0 0.0
    %517 = vmatpush1.msra.mxu0 0.0
    %518 = vmatprep.subr.mxu0 0.0
    %519 = vmatpush1.msra.mxu0 0.0
    %520 = vmatprep.subr.mxu0 0.0
    %521 = vmatpush1.msra.mxu0 0.0
    %522 = vmatprep.subr.mxu0 0.0
    %523 = vmatpush1.msra.mxu0 0.0
    %524 = vmatprep.subr.mxu0 0.0
    %525 = vmatpush1.msra.mxu0 0.0
    %526 = vmatprep.subr.mxu0 0.0
    %527 = vmatpush1.msra.mxu0 0.0
    %528 = vmatprep.subr.mxu0 0.0
    %529 = vmatpush1.msra.mxu0 0.0
    %530 = vmatprep.subr.mxu0 0.0
    %531 = vmatpush1.msra.mxu0 0.0
    %532 = vmatprep.subr.mxu0 0.0
    %533 = vmatpush1.msra.mxu0 0.0
    %534 = vmatprep.subr.mxu0 0.0
    %535 = vmatpush1.msra.mxu0 0.0
    %536 = vmatprep.subr.mxu0 0.0
    %537 = vmatpush1.msra.mxu0 0.0
    %538 = vmatprep.mubr.f32.mxu0 0.0
    %539 = vmatmul.mubr.f32.gmra.mrb[0].mxu0 %v472
    %v540 = vpop.f32.mrb[0].mxu0
    %v541 = vadd.f32 0.0, %v540
    %v542 = vpop.f32.mrb[0].mxu0
    %v543 = vadd.f32 0.0, %v542
    %544 = vdwg.mxu0
    %545 = vmatprep.subr.mxu0 0.0
    %546 = vmatpush1.msra.mxu0 %v461
    %547 = vmatprep.subr.mxu0 0.0
    %548 = vmatpush1.msra.mxu0 %v464
    %549 = vmatprep.subr.mxu0 0.0
    %550 = vmatpush1.msra.mxu0 %v467
    %551 = vmatprep.subr.mxu0 0.0
    %552 = vmatpush1.msra.mxu0 %v470
    %553 = vmatprep.subr.mxu0 0.0
    %554 = vmatpush1.msra.mxu0 0.0
    %555 = vmatprep.subr.mxu0 0.0
    %556 = vmatpush1.msra.mxu0 0.0
    %557 = vmatprep.subr.mxu0 0.0
    %558 = vmatpush1.msra.mxu0 0.0
    %559 = vmatprep.subr.mxu0 0.0
    %560 = vmatpush1.msra.mxu0 0.0
    %561 = vmatprep.subr.mxu0 0.0
    %562 = vmatpush1.msra.mxu0 0.0
    %563 = vmatprep.subr.mxu0 0.0
    %564 = vmatpush1.msra.mxu0 0.0
    %565 = vmatprep.subr.mxu0 0.0
    %566 = vmatpush1.msra.mxu0 0.0
    %567 = vmatprep.subr.mxu0 0.0
    %568 = vmatpush1.msra.mxu0 0.0
    %569 = vmatprep.subr.mxu0 0.0
    %570 = vmatpush1.msra.mxu0 0.0
    %571 = vmatprep.subr.mxu0 0.0
    %572 = vmatpush1.msra.mxu0 0.0
    %573 = vmatprep.subr.mxu0 0.0
    %574 = vmatpush1.msra.mxu0 0.0
    %575 = vmatprep.subr.mxu0 0.0
    %576 = vmatpush1.msra.mxu0 0.0
    %577 = vmatprep.subr.mxu0 0.0
    %578 = vmatpush1.msra.mxu0 0.0
    %579 = vmatprep.subr.mxu0 0.0
    %580 = vmatpush1.msra.mxu0 0.0
    %581 = vmatprep.subr.mxu0 0.0
    %582 = vmatpush1.msra.mxu0 0.0
    %583 = vmatprep.subr.mxu0 0.0
    %584 = vmatpush1.msra.mxu0 0.0
    %585 = vmatprep.subr.mxu0 0.0
    %586 = vmatpush1.msra.mxu0 0.0
    %587 = vmatprep.subr.mxu0 0.0
    %588 = vmatpush1.msra.mxu0 0.0
    %589 = vmatprep.subr.mxu0 0.0
    %590 = vmatpush1.msra.mxu0 0.0
    %591 = vmatprep.subr.mxu0 0.0
    %592 = vmatpush1.msra.mxu0 0.0
    %593 = vmatprep.subr.mxu0 0.0
    %594 = vmatpush1.msra.mxu0 0.0
    %595 = vmatprep.subr.mxu0 0.0
    %596 = vmatpush1.msra.mxu0 0.0
    %597 = vmatprep.subr.mxu0 0.0
    %598 = vmatpush1.msra.mxu0 0.0
    %599 = vmatprep.subr.mxu0 0.0
    %600 = vmatpush1.msra.mxu0 0.0
    %601 = vmatprep.subr.mxu0 0.0
    %602 = vmatpush1.msra.mxu0 0.0
    %603 = vmatprep.subr.mxu0 0.0
    %604 = vmatpush1.msra.mxu0 0.0
    %605 = vmatprep.subr.mxu0 0.0
    %606 = vmatpush1.msra.mxu0 0.0
    %607 = vmatprep.subr.mxu0 0.0
    %608 = vmatpush1.msra.mxu0 0.0
    %609 = vmatprep.mubr.f32.mxu0 0.0
    %610 = vmatmul.mubr.f32.gmra.mrb[0].mxu0 %v472
    %v611 = vpop.f32.mrb[0].mxu0
    %v612 = vadd.f32 0.0, %v611
    %v613 = vpop.f32.mrb[0].mxu0
    %614 = vdwg.mxu0
    %v615 = vadd.f32 %v385, %v541
    %v616 = vadd.f32 %v387, %v543
    %v617 = vadd.f32 %v456, %v612
    %v618 = vld [vmem:[%s7] sm:$0x7]
    %v620 = vlaneseq
    %v621 = vshrl.u32 %v620, 7
    %v622 = vsub.s32 0, %v621
    %v623 = vrot.slane %v618, %v622
    %v624 = vlaneseq
    %v625 = vshrl.u32 %v624, 7
    %v626 = vsub.s32 1, %v625
    %v627 = vrot.slane %v618, %v626
    %v628 = vlaneseq
    %v629 = vshrl.u32 %v628, 7
    %v630 = vsub.s32 2, %v629
    %v631 = vrot.slane %v618, %v630
    %v635 = vadd.f32 %v615, %v623
    %v636 = vadd.f32 %v616, %v627
    %v637 = vadd.f32 %v617, %v631
    %v638 = vsub.f32 0.0, %v635
    %v639 = vmul.f32 %v638, 1.442695
    %v640 = vpow.pop %v639
    %v641 = vadd.f32 %v640, 1.0
    %v642 = vrcp.pop %v641
    %v643 = vsub.f32 0.0, %v636
    %v644 = vmul.f32 %v643, 1.442695
    %v645 = vpow.pop %v644
    %v646 = vadd.f32 %v645, 1.0
    %v647 = vrcp.pop %v646
    %v648 = vld [vmem:[#allocation14] sm:$0xff]
    %v649 = vld [vmem:[#allocation14 + $0x8] sm:$0xff]
    %v650 = vld [vmem:[#allocation14 + $0x10] sm:$0xff]
    %v651 = vld [vmem:[#allocation14 + $0x18] sm:$0xff]
    %652 = vmatprep.subr.mxu0 0.0
    %653 = vmatpush1.msra.mxu0 %v648
    %654 = vmatprep.subr.mxu0 0.0
    %655 = vmatpush1.msra.mxu0 %v649
    %656 = vmatprep.subr.mxu0 0.0
    %657 = vmatpush1.msra.mxu0 %v650
    %658 = vmatprep.subr.mxu0 0.0
    %659 = vmatpush1.msra.mxu0 %v651
    %660 = vmatprep.subr.mxu0 0.0
    %661 = vmatpush1.msra.mxu0 0.0
    %662 = vmatprep.subr.mxu0 0.0
    %663 = vmatpush1.msra.mxu0 0.0
    %664 = vmatprep.subr.mxu0 0.0
    %665 = vmatpush1.msra.mxu0 0.0
    %666 = vmatprep.subr.mxu0 0.0
    %667 = vmatpush1.msra.mxu0 0.0
    %668 = vmatprep.subr.mxu0 0.0
    %669 = vmatpush1.msra.mxu0 0.0
    %670 = vmatprep.subr.mxu0 0.0
    %671 = vmatpush1.msra.mxu0 0.0
    %672 = vmatprep.subr.mxu0 0.0
    %673 = vmatpush1.msra.mxu0 0.0
    %674 = vmatprep.subr.mxu0 0.0
    %675 = vmatpush1.msra.mxu0 0.0
    %676 = vmatprep.subr.mxu0 0.0
    %677 = vmatpush1.msra.mxu0 0.0
    %678 = vmatprep.subr.mxu0 0.0
    %679 = vmatpush1.msra.mxu0 0.0
    %680 = vmatprep.subr.mxu0 0.0
    %681 = vmatpush1.msra.mxu0 0.0
    %682 = vmatprep.subr.mxu0 0.0
    %683 = vmatpush1.msra.mxu0 0.0
    %684 = vmatprep.subr.mxu0 0.0
    %685 = vmatpush1.msra.mxu0 0.0
    %686 = vmatprep.subr.mxu0 0.0
    %687 = vmatpush1.msra.mxu0 0.0
    %688 = vmatprep.subr.mxu0 0.0
    %689 = vmatpush1.msra.mxu0 0.0
    %690 = vmatprep.subr.mxu0 0.0
    %691 = vmatpush1.msra.mxu0 0.0
    %692 = vmatprep.subr.mxu0 0.0
    %693 = vmatpush1.msra.mxu0 0.0
    %694 = vmatprep.subr.mxu0 0.0
    %695 = vmatpush1.msra.mxu0 0.0
    %696 = vmatprep.subr.mxu0 0.0
    %697 = vmatpush1.msra.mxu0 0.0
    %698 = vmatprep.subr.mxu0 0.0
    %699 = vmatpush1.msra.mxu0 0.0
    %700 = vmatprep.subr.mxu0 0.0
    %701 = vmatpush1.msra.mxu0 0.0
    %702 = vmatprep.subr.mxu0 0.0
    %703 = vmatpush1.msra.mxu0 0.0
    %704 = vmatprep.subr.mxu0 0.0
    %705 = vmatpush1.msra.mxu0 0.0
    %706 = vmatprep.subr.mxu0 0.0
    %707 = vmatpush1.msra.mxu0 0.0
    %708 = vmatprep.subr.mxu0 0.0
    %709 = vmatpush1.msra.mxu0 0.0
    %710 = vmatprep.subr.mxu0 0.0
    %711 = vmatpush1.msra.mxu0 0.0
    %712 = vmatprep.subr.mxu0 0.0
    %713 = vmatpush1.msra.mxu0 0.0
    %714 = vmatprep.subr.mxu0 0.0
    %715 = vmatpush1.msra.mxu0 0.0
    %716 = vmatprep.mubr.f32.mxu0 0.0
    %717 = vmatmul.mubr.f32.gmra.mrb[0].mxu0 %v472
    %v718 = vpop.f32.mrb[0].mxu0
    %v719 = vadd.f32 0.0, %v718
    %v720 = vpop.f32.mrb[0].mxu0
    %721 = vdwg.mxu0
    %v722 = vmul.f32 %v719, %v647
    %v723 = vld [vmem:[#allocation13] sm:$0xff]
    %v724 = vld [vmem:[#allocation13 + $0x8] sm:$0xff]
    %v725 = vld [vmem:[#allocation13 + $0x10] sm:$0xff]
    %v726 = vld [vmem:[#allocation13 + $0x18] sm:$0xff]
    %v727 = vld [vmem:[#allocation13 + $0x20] sm:$0xff]
    %v728 = vld [vmem:[#allocation13 + $0x28] sm:$0xff]
    %v729 = vld [vmem:[#allocation13 + $0x30] sm:$0xff]
    %v730 = vld [vmem:[#allocation13 + $0x38] sm:$0xff]
    %v731 = vld [vmem:[#allocation13 + $0x40] sm:$0xff]
    %v732 = vld [vmem:[#allocation13 + $0x48] sm:$0xff]
    %v733 = vld [vmem:[#allocation13 + $0x50] sm:$0xff]
    %v734 = vld [vmem:[#allocation13 + $0x58] sm:$0xff]
    %v735 = vld [vmem:[#allocation13 + $0x60] sm:$0xff]
    %v736 = vld [vmem:[#allocation13 + $0x68] sm:$0xff]
    %v737 = vld [vmem:[#allocation13 + $0x70] sm:$0xff]
    %v738 = vld [vmem:[#allocation13 + $0x78] sm:$0xff]
    %739 = vmatprep.subr.mxu0 0.0
    %740 = vmatpush1.msra.mxu0 %v723
    %741 = vmatprep.subr.mxu0 0.0
    %742 = vmatpush1.msra.mxu0 %v724
    %743 = vmatprep.subr.mxu0 0.0
    %744 = vmatpush1.msra.mxu0 %v725
    %745 = vmatprep.subr.mxu0 0.0
    %746 = vmatpush1.msra.mxu0 %v726
    %747 = vmatprep.subr.mxu0 0.0
    %748 = vmatpush1.msra.mxu0 %v727
    %749 = vmatprep.subr.mxu0 0.0
    %750 = vmatpush1.msra.mxu0 %v728
    %751 = vmatprep.subr.mxu0 0.0
    %752 = vmatpush1.msra.mxu0 %v729
    %753 = vmatprep.subr.mxu0 0.0
    %754 = vmatpush1.msra.mxu0 %v730
    %755 = vmatprep.subr.mxu0 0.0
    %756 = vmatpush1.msra.mxu0 %v731
    %757 = vmatprep.subr.mxu0 0.0
    %758 = vmatpush1.msra.mxu0 %v732
    %759 = vmatprep.subr.mxu0 0.0
    %760 = vmatpush1.msra.mxu0 %v733
    %761 = vmatprep.subr.mxu0 0.0
    %762 = vmatpush1.msra.mxu0 %v734
    %763 = vmatprep.subr.mxu0 0.0
    %764 = vmatpush1.msra.mxu0 %v735
    %765 = vmatprep.subr.mxu0 0.0
    %766 = vmatpush1.msra.mxu0 %v736
    %767 = vmatprep.subr.mxu0 0.0
    %768 = vmatpush1.msra.mxu0 %v737
    %769 = vmatprep.subr.mxu0 0.0
    %770 = vmatpush1.msra.mxu0 %v738
    %771 = vmatprep.subr.mxu0 0.0
    %772 = vmatpush1.msra.mxu0 0.0
    %773 = vmatprep.subr.mxu0 0.0
    %774 = vmatpush1.msra.mxu0 0.0
    %775 = vmatprep.subr.mxu0 0.0
    %776 = vmatpush1.msra.mxu0 0.0
    %777 = vmatprep.subr.mxu0 0.0
    %778 = vmatpush1.msra.mxu0 0.0
    %779 = vmatprep.subr.mxu0 0.0
    %780 = vmatpush1.msra.mxu0 0.0
    %781 = vmatprep.subr.mxu0 0.0
    %782 = vmatpush1.msra.mxu0 0.0
    %783 = vmatprep.subr.mxu0 0.0
    %784 = vmatpush1.msra.mxu0 0.0
    %785 = vmatprep.subr.mxu0 0.0
    %786 = vmatpush1.msra.mxu0 0.0
    %787 = vmatprep.subr.mxu0 0.0
    %788 = vmatpush1.msra.mxu0 0.0
    %789 = vmatprep.subr.mxu0 0.0
    %790 = vmatpush1.msra.mxu0 0.0
    %791 = vmatprep.subr.mxu0 0.0
    %792 = vmatpush1.msra.mxu0 0.0
    %793 = vmatprep.subr.mxu0 0.0
    %794 = vmatpush1.msra.mxu0 0.0
    %795 = vmatprep.subr.mxu0 0.0
    %796 = vmatpush1.msra.mxu0 0.0
    %797 = vmatprep.subr.mxu0 0.0
    %798 = vmatpush1.msra.mxu0 0.0
    %799 = vmatprep.subr.mxu0 0.0
    %800 = vmatpush1.msra.mxu0 0.0
    %801 = vmatprep.subr.mxu0 0.0
    %802 = vmatpush1.msra.mxu0 0.0
    %803 = vmatprep.mubr.f32.mxu0 0.0
    %804 = vmatmul.mubr.f32.gmra.mrb[0].mxu0 %v722
    %v805 = vpop.f32.mrb[0].mxu0
    %v806 = vadd.f32 0.0, %v805
    %v807 = vpop.f32.mrb[0].mxu0
    %808 = vdwg.mxu0
    %v809 = vadd.f32 %v637, %v806
    %v810 = vmax.f32 %v809, 0.0
    %v811 = vsub.f32 %v810, %v719
    %v812 = vmul.f32 %v642, %v811
    %v813 = vadd.f32 %v719, %v812
    %814 = vst [vmem:[#allocation16] sm:$0xff] %v813
    // Predicated region
    $region70: #{tpu_custom_call.1} parent=1 // pred_check
      _
    $region71: #{tpu_custom_call.1} parent=1 // pred_check_branch
      %816 = sbr.rel (0) target = $region73
    $region72: #{tpu_custom_call.1} parent=1 // pred_region
      %s818 = ssub.s32 128, 128
      %819 = vsyncadd [#allocation4], %s818
      %s821 = sshll.u32 [#allocation16], 4
      %s822 = int_to_ptr.vmem [resolvable:$true] %s821
      %824 = dma.vmem_to_hbm [thread:$0]  %s822, 128, %s9, [#allocation4]
    $region73: #{tpu_custom_call.1} parent=1 // pred_fallthru
      _
    // Predicated region
    $region74: #{tpu_custom_call.1} parent=1 // pred_check
      _
    $region75: #{tpu_custom_call.1} parent=1 // pred_check_branch
      %826 = sbr.rel (0) target = $region77
    $region76: #{tpu_custom_call.1} parent=1 // pred_region
      %827 = dma.done [#allocation4], 128
    $region77: #{tpu_custom_call.1} parent=1 // pred_fallthru
      _
    %828 = vsyncpa [#allocation3], 1
    %829 = vsyncpa [#allocation6], 1
    %830 = vsyncpa [#allocation9], 1
    %831 = vsyncpa [#allocation12], 1
    %832 = vsyncpa [#allocation15], 1
    %833 = vsyncpa [#allocation4], 1

</llo_original>
